<compile_context>
chip_gen: v7x
topology: tpu7x:2x2x1
jax: 0.10.0
libtpu: 0.0.40
codegen_flags: <defaults>
</compile_context>

<pallas_src>
import numpy as np
import jax
import jax.numpy as jnp
from jax.experimental import pallas as pl
from jax.experimental.pallas import tpu as pltpu


# ----------------------------- Pallas kernels ------------------------------ #
def _convs_and_blend(m_up_c, bg32, id32, w1m, w1bg, w1id, b1, w2, b2, w3, b3):
    """All activations are [C, PT] (channels x pixels).
    1x1 convs in channels-first layout are W[Cout,Cin] @ x[Cin,PT].
    bg32/id32 arrive as the native f32 streams; MXU operands are cast to the
    weight dtype (bf16 on the perf path) just before each matmul."""
    cdtype = w1m.dtype
    bg_c = bg32.astype(cdtype)
    id_c = id32.astype(cdtype)
    # _fc_l1[0]: Conv2d(3C -> C, k=1) on cat([m, bg, id]) split along Cin.
    h = (jnp.dot(w1m, m_up_c, preferred_element_type=jnp.float32)
         + jnp.dot(w1bg, bg_c, preferred_element_type=jnp.float32)
         + jnp.dot(w1id, id_c, preferred_element_type=jnp.float32)
         + b1)
    # _fc_l1[1]: ReLU ; _fc_l1[2]: Conv2d(C -> C, k=1)
    h = jnp.maximum(h, 0.0).astype(cdtype)
    wl1 = (jnp.dot(w2, h, preferred_element_type=jnp.float32) + b2).astype(cdtype)
    # _fc: Conv2d(C -> C, k=1), sigmoid (explicit exp on EUP + reciprocal)
    logits = jnp.dot(w3, wl1, preferred_element_type=jnp.float32) + b3
    w = 1.0 / (1.0 + jnp.exp(-logits))
    # blend: w*bg + (1-w)*id == id + w*(bg - id), computed on the f32 inputs.
    return id32 + w * (bg32 - id32)


def _merge_kernel_fused(m_ref, ut_ref, bg_ref, id_ref,
                        w1m_ref, w1bg_ref, w1id_ref, b1_ref,
                        w2_ref, b2_ref, w3_ref, b3_ref, out_ref):
    """Fused x4 bilinear upsample (Kronecker interp matrix tile) + convs + blend."""
    cdtype = w1m_ref.dtype
    # [C, Pm] @ [Pm, PT] -> upsampled m tile [C, PT]; never round-trips HBM.
    m_up = jnp.dot(m_ref[...].astype(cdtype), ut_ref[...],
                   preferred_element_type=jnp.float32)
    out = _convs_and_blend(m_up.astype(cdtype), bg_ref[...], id_ref[...],
                           w1m_ref[...], w1bg_ref[...], w1id_ref[...], b1_ref[...],
                           w2_ref[...], b2_ref[...], w3_ref[...], b3_ref[...])
    out_ref[...] = out.astype(out_ref.dtype)


def _merge_kernel_preup(m_ref, bg_ref, id_ref,
                        w1m_ref, w1bg_ref, w1id_ref, b1_ref,
                        w2_ref, b2_ref, w3_ref, b3_ref, out_ref):
    """Fallback for very large low-res frames: feat_m upsampled outside."""
    cdtype = w1m_ref.dtype
    out = _convs_and_blend(m_ref[...].astype(cdtype), bg_ref[...], id_ref[...],
                           w1m_ref[...], w1bg_ref[...], w1id_ref[...], b1_ref[...],
                           w2_ref[...], b2_ref[...], w3_ref[...], b3_ref[...])
    out_ref[...] = out.astype(out_ref.dtype)


# ------------------------------ glue / setup ------------------------------- #
def _bilinear_up2_matrix(n_in: int) -> np.ndarray:
    """U (2n, n) s.t. U @ x == bilinear x2 upsample, align_corners=True
    (matches torch nn.Upsample(scale_factor=2, 'bilinear', align_corners=True))."""
    n_out = 2 * n_in
    if n_in == 1:
        return np.ones((n_out, 1), np.float32)
    U = np.zeros((n_out, n_in), np.float32)
    scale = (n_in - 1) / (n_out - 1)
    for i in range(n_out):
        x = i * scale
        i0 = int(np.floor(x))
        i1 = min(i0 + 1, n_in - 1)
        f = x - i0
        U[i, i0] += 1.0 - f
        U[i, i1] += f
    return U


def _up4_matrix(n_in: int) -> np.ndarray:
    """Two consecutive x2 bilinear (align_corners=True) upsamples composed
    (the module applies self.upsample twice)."""
    u1 = _bilinear_up2_matrix(n_in)          # (2n, n)
    u2 = _bilinear_up2_matrix(2 * n_in)      # (4n, 2n)
    return (u2 @ u1).astype(np.float32)      # (4n, n)


def _vmem_capacity_bytes() -> int:
    """Per-core VMEM capacity; conservative (v7x-sized) default if unknown."""
    try:
        info = pltpu.get_tpu_info()
        cap = int(getattr(info, "vmem_capacity_bytes", 0) or 0)
        if cap > 0:
            return cap
    except Exception:
        pass
    return 64 << 20


def _pick_pt(P: int, cap_cols: int) -> int:
    """Largest lane-dense (multiple-of-128) divisor of P that is <= cap_cols.
    Falls back to full P when P is small / not 128-divisible (block == full dim
    is always legal), so edge tiles are never ragged."""
    if P <= cap_cols or P < 128 or P % 128 != 0:
        return P
    best = 128
    d = 128
    while d <= cap_cols:
        if P % d == 0:
            best = d
        d += 128
    return best


def init_params(key, d_model: int):
    """Deterministic synthetic parameters, PyTorch orientation:
    conv weight [Cout, Cin] (k=1 squeezed), bias [Cout]."""
    C = d_model
    ks = jax.random.split(key, 6)
    s = 0.2
    return dict(
        w1=jax.random.normal(ks[0], (C, 3 * C), jnp.float32) * s,   # _fc_l1[0]
        b1=jax.random.normal(ks[1], (C,), jnp.float32) * s,
        w2=jax.random.normal(ks[2], (C, C), jnp.float32) * s,       # _fc_l1[2]
        b2=jax.random.normal(ks[3], (C,), jnp.float32) * s,
        w3=jax.random.normal(ks[4], (C, C), jnp.float32) * s,       # _fc
        b3=jax.random.normal(ks[5], (C,), jnp.float32) * s,
    )


def merge_forward(feat_bg, feat_id, feat_m, params, *, use_bf16=True, out_dtype=None):
    """Pallas implementation of MergeModule_simple.forward.

    feat_bg/feat_id: [B, T, C, HC, WC];  feat_m: [B, T, C, HM, WM], HC=4*HM.
    use_bf16: carry MXU operands (weights, interp matrix, activation casts) in
              bf16 with f32 accumulation; blend stays f32 on native inputs.
    out_dtype: output dtype (None -> input dtype, matching PyTorch semantics;
               pass jnp.bfloat16 to halve the output HBM stream).
    """
    B, T, C, HC, WC = feat_bg.shape
    _, _, _, HM, WM = feat_m.shape
    assert HC == 4 * HM and WC == 4 * WM, "expected HC = 4*HM, WC = 4*WM"
    BT, P, Pm = B * T, HC * WC, HM * WM

    cdtype = jnp.bfloat16 if use_bf16 else jnp.float32
    cbytes = 2 if use_bf16 else 4
    out_dtype = feat_bg.dtype if out_dtype is None else out_dtype
    out_bytes = jnp.dtype(out_dtype).itemsize

    # Channels-first, pixels-on-lanes: free reshapes, NATIVE f32 streams
    # (no wrapper-side astype pass over the dominant tensors).
    bg = feat_bg.reshape(BT, C, P)
    fid = feat_id.reshape(BT, C, P)

    # Weights already in [Cout, Cin] orientation -> usable directly as LHS.
    w1 = params['w1'].astype(cdtype)
    w1m, w1bg, w1id = w1[:, :C], w1[:, C:2 * C], w1[:, 2 * C:]   # cat order [m,bg,id]
    w2 = params['w2'].astype(cdtype)
    w3 = params['w3'].astype(cdtype)
    b1 = params['b1'].reshape(C, 1).astype(jnp.float32)
    b2 = params['b2'].reshape(C, 1).astype(jnp.float32)
    b3 = params['b3'].reshape(C, 1).astype(jnp.float32)
    weight_args = (w1m, w1bg, w1id, b1, w2, b2, w3, b3)

    # Fuse the x4 upsample in-kernel while the Kronecker interp matrix is modest.
    # TODO(synk): a separable (height-then-width) in-kernel upsample would drop
    # the dense [Pm, PT] matrix entirely and retire this threshold.
    fuse_upsample = Pm <= 2048

    # ---- generation-aware VMEM / tile policy -------------------------------
    vmem_cap = _vmem_capacity_bytes()
    big_vmem = vmem_cap >= (100 << 20)                    # v5e / v6e: 128 MiB
    vmem_limit = (96 << 20) if big_vmem else (40 << 20)   # v7x: only 64 MiB
    target_pt = 8192 if big_vmem else 2048

    # VMEM that does NOT scale with the pixel tile: double-buffered weights,
    # the resident low-res m block, plus Mosaic-internal scratch headroom.
    resident = 2 * (5 * C * C * cbytes + 3 * C * 4)
    if fuse_upsample:
        resident += 2 * C * Pm * 4
    budget = vmem_limit - resident - (4 << 20)

    # Bytes per pixel column: double-buffered bg/id/out blocks, the UT tile
    # (or the pre-upsampled m stream), and the in-kernel f32/bf16 temporaries
    # (m_up, h, wl1, logits/w, casts, staged output).
    per_col = C * (2 * 4 + 2 * 4 + 2 * out_bytes)         # bg + id + out streams
    per_col += C * (6 * 4 + 4 * cbytes)                   # in-kernel temporaries
    per_col += (2 * Pm * cbytes) if fuse_upsample else (2 * C * cbytes)

    cap_cols = max(128, budget // per_col)
    PT = _pick_pt(P, int(min(target_pt, cap_cols)))
    n_pix = pl.cdiv(P, PT)

    # Grid order: keep the UT tile resident across the inner frame sweep when
    # the upsample is fused and there are >=2 pixel tiles; otherwise frames on
    # the outer (parallel) axis for better megacore balance (v7x).
    pix_outer = fuse_upsample and n_pix >= 2
    if pix_outer:
        grid = (n_pix, BT)
        order = lambda fn: (lambda j, f: fn(f, j))
    else:
        grid = (BT, n_pix)
        order = lambda fn: (lambda f, j: fn(f, j))

    act_spec = pl.BlockSpec((None, C, PT), order(lambda f, j: (f, 0, j)))
    w_spec = lambda shape: pl.BlockSpec(shape, order(lambda f, j: (0, 0)))
    weight_specs = [w_spec((C, C)), w_spec((C, C)), w_spec((C, C)), w_spec((C, 1)),
                    w_spec((C, C)), w_spec((C, 1)), w_spec((C, C)), w_spec((C, 1))]

    cparams = pltpu.CompilerParams(
        dimension_semantics=("parallel", "parallel"),
        vmem_limit_bytes=int(vmem_limit),
    )
    out_shape = jax.ShapeDtypeStruct((BT, C, P), out_dtype)

    if fuse_upsample:
        # Kronecker matrix U4[p, q] = Uh[i,h]*Uw[j,w]; kernel computes m @ U4^T.
        UT = jnp.asarray(np.kron(_up4_matrix(HM), _up4_matrix(WM)).T, dtype=cdtype)
        m_small = feat_m.reshape(BT, C, Pm)                       # tiny f32 stream
        in_specs = [pl.BlockSpec((None, C, Pm), order(lambda f, j: (f, 0, 0))),
                    pl.BlockSpec((Pm, PT), order(lambda f, j: (0, j))),
                    act_spec, act_spec] + weight_specs
        out = pl.pallas_call(
            _merge_kernel_fused, out_shape=out_shape, grid=grid,
            in_specs=in_specs, out_specs=act_spec, compiler_params=cparams,
        )(m_small, UT, bg, fid, *weight_args)
    else:
        # Separable (height x width) precompute, streamed in the compute dtype.
        Uh = jnp.asarray(_up4_matrix(HM))
        Uw = jnp.asarray(_up4_matrix(WM))
        m_up = jnp.einsum('ih,jw,fchw->fcij', Uh, Uw,
                          feat_m.reshape(BT, C, HM, WM)).reshape(BT, C, P).astype(cdtype)
        in_specs = [act_spec, act_spec, act_spec] + weight_specs
        out = pl.pallas_call(
            _merge_kernel_preup, out_shape=out_shape, grid=grid,
            in_specs=in_specs, out_specs=act_spec, compiler_params=cparams,
        )(m_up, bg, fid, *weight_args)

    return out.reshape(B, T, C, HC, WC)


def merge_reference(feat_bg, feat_id, feat_m, params):
    """Pure-JAX f32 reference mirroring the PyTorch forward exactly."""
    HM, WM = feat_m.shape[3], feat_m.shape[4]
    Uh = jnp.asarray(_up4_matrix(HM))
    Uw = jnp.asarray(_up4_matrix(WM))
    m_up = jnp.einsum('ih,jw,btchw->btcij', Uh, Uw, feat_m)        # two x2 bilinear ups
    cat = jnp.concatenate([m_up, feat_bg, feat_id], axis=2)        # [B,T,3C,HC,WC]

    def conv1x1(x, w, b):
        return jnp.einsum('oc,btchw->btohw', w, x) + b[None, None, :, None, None]

    h = jnp.maximum(conv1x1(cat, params['w1'], params['b1']), 0.0)
    wl1 = conv1x1(h, params['w2'], params['b2'])
    w = jax.nn.sigmoid(conv1x1(wl1, params['w3'], params['b3']))
    return w * feat_bg + (1.0 - w) * feat_id


if __name__ == "__main__":
    key = jax.random.PRNGKey(0)
    B, T, d_model, HM, WM = 2, 2, 8, 4, 4
    HC, WC = 4 * HM, 4 * WM

    k0, k1, k2, k3 = jax.random.split(key, 4)
    feat_bg = jax.random.normal(k0, (B, T, d_model, HC, WC), jnp.float32)
    feat_id = jax.random.normal(k1, (B, T, d_model, HC, WC), jnp.float32)
    feat_m = jax.random.normal(k2, (B, T, d_model, HM, WM), jnp.float32)
    params = init_params(k3, d_model)

    ref = merge_reference(feat_bg, feat_id, feat_m, params)

    # Performance path: bf16 MXU operands, f32 accumulation, f32 blend on the
    # native f32 inputs (no wrapper-side casts of the dominant streams).
    out_bf16 = merge_forward(feat_bg, feat_id, feat_m, params, use_bf16=True)
    jax.block_until_ready(out_bf16)
    assert out_bf16.shape == (B, T, d_model, HC, WC)
    np.testing.assert_allclose(np.asarray(out_bf16), np.asarray(ref),
                               rtol=5e-2, atol=5e-2)   # bf16 matmuls vs f32 reference

    # Exactness path: same kernel in full f32 -> tight tolerance.
    out_f32 = merge_forward(feat_bg, feat_id, feat_m, params, use_bf16=False)
    jax.block_until_ready(out_f32)
    np.testing.assert_allclose(np.asarray(out_f32), np.asarray(ref),
                               rtol=1e-4, atol=1e-4)

    print("KERNEL_OK")
</pallas_src>

<mosaic_0001>
module attributes {stable_mosaic.version = 11 : i64} {
  func.func @_merge_kernel_fused(%arg0: i32, %arg1: i32, %arg2: memref<1x8x16xf32, #tpu.memory_space<vmem>>, %arg3: memref<16x256xbf16, #tpu.memory_space<vmem>>, %arg4: memref<1x8x256xf32, #tpu.memory_space<vmem>>, %arg5: memref<1x8x256xf32, #tpu.memory_space<vmem>>, %arg6: memref<8x8xbf16, #tpu.memory_space<vmem>>, %arg7: memref<8x8xbf16, #tpu.memory_space<vmem>>, %arg8: memref<8x8xbf16, #tpu.memory_space<vmem>>, %arg9: memref<8x1xf32, #tpu.memory_space<vmem>>, %arg10: memref<8x8xbf16, #tpu.memory_space<vmem>>, %arg11: memref<8x1xf32, #tpu.memory_space<vmem>>, %arg12: memref<8x8xbf16, #tpu.memory_space<vmem>>, %arg13: memref<8x1xf32, #tpu.memory_space<vmem>>, %arg14: memref<1x8x256xf32, #tpu.memory_space<vmem>>) attributes {dimension_semantics = [#tpu.dimension_semantics<parallel>, #tpu.dimension_semantics<parallel>], iteration_bounds = array<i64: 4, 1>, scalar_prefetch = 0 : i64, scratch_operands = 0 : i64, tpu.core_type = #tpu.core_type<tc>, window_params = [{transform_indices = @transform_0, window_bounds = array<i64: 1, 8, 16>}, {transform_indices = @transform_1, window_bounds = array<i64: 16, 256>}, {transform_indices = @transform_2, window_bounds = array<i64: 1, 8, 256>}, {transform_indices = @transform_3, window_bounds = array<i64: 1, 8, 256>}, {pipeline_mode = #tpu.pipeline_mode<synchronous>, transform_indices = @transform_4, window_bounds = array<i64: 8, 8>}, {pipeline_mode = #tpu.pipeline_mode<synchronous>, transform_indices = @transform_5, window_bounds = array<i64: 8, 8>}, {pipeline_mode = #tpu.pipeline_mode<synchronous>, transform_indices = @transform_6, window_bounds = array<i64: 8, 8>}, {pipeline_mode = #tpu.pipeline_mode<synchronous>, transform_indices = @transform_7, window_bounds = array<i64: 8, 1>}, {pipeline_mode = #tpu.pipeline_mode<synchronous>, transform_indices = @transform_8, window_bounds = array<i64: 8, 8>}, {pipeline_mode = #tpu.pipeline_mode<synchronous>, transform_indices = @transform_9, window_bounds = array<i64: 8, 1>}, {pipeline_mode = #tpu.pipeline_mode<synchronous>, transform_indices = @transform_10, window_bounds = array<i64: 8, 8>}, {pipeline_mode = #tpu.pipeline_mode<synchronous>, transform_indices = @transform_11, window_bounds = array<i64: 8, 1>}, {transform_indices = @transform_12, window_bounds = array<i64: 1, 8, 256>}]} {
    %c0 = arith.constant 0 : index
    %c0_0 = arith.constant 0 : index
    %c0_1 = arith.constant 0 : index
    %0 = vector.load %arg2[%c0, %c0_0, %c0_1] : memref<1x8x16xf32, #tpu.memory_space<vmem>>, vector<1x8x16xf32>
    %1 = vector.shape_cast %0 : vector<1x8x16xf32> to vector<8x16xf32>
    %2 = arith.truncf %1 : vector<8x16xf32> to vector<8x16xbf16>
    %c0_2 = arith.constant 0 : index
    %c0_3 = arith.constant 0 : index
    %3 = vector.load %arg3[%c0_2, %c0_3] : memref<16x256xbf16, #tpu.memory_space<vmem>>, vector<16x256xbf16>
    %cst = arith.constant dense<0.000000e+00> : vector<8x256xf32>
    %4 = tpu.matmul %2, %3, %cst {dimension_numbers = #tpu.dot_dimension_numbers<[1], [0], [0], [1], [0, 0, 1, 1], [], []>} : vector<8x16xbf16>, vector<16x256xbf16>, vector<8x256xf32> -> vector<8x256xf32>
    %5 = arith.truncf %4 : vector<8x256xf32> to vector<8x256xbf16>
    %c0_4 = arith.constant 0 : index
    %c0_5 = arith.constant 0 : index
    %c0_6 = arith.constant 0 : index
    %6 = vector.load %arg4[%c0_4, %c0_5, %c0_6] : memref<1x8x256xf32, #tpu.memory_space<vmem>>, vector<1x8x256xf32>
    %7 = vector.shape_cast %6 : vector<1x8x256xf32> to vector<8x256xf32>
    %c0_7 = arith.constant 0 : index
    %c0_8 = arith.constant 0 : index
    %c0_9 = arith.constant 0 : index
    %8 = vector.load %arg5[%c0_7, %c0_8, %c0_9] : memref<1x8x256xf32, #tpu.memory_space<vmem>>, vector<1x8x256xf32>
    %9 = vector.shape_cast %8 : vector<1x8x256xf32> to vector<8x256xf32>
    %c0_10 = arith.constant 0 : index
    %c0_11 = arith.constant 0 : index
    %10 = vector.load %arg6[%c0_10, %c0_11] : memref<8x8xbf16, #tpu.memory_space<vmem>>, vector<8x8xbf16>
    %c0_12 = arith.constant 0 : index
    %c0_13 = arith.constant 0 : index
    %11 = vector.load %arg7[%c0_12, %c0_13] : memref<8x8xbf16, #tpu.memory_space<vmem>>, vector<8x8xbf16>
    %c0_14 = arith.constant 0 : index
    %c0_15 = arith.constant 0 : index
    %12 = vector.load %arg8[%c0_14, %c0_15] : memref<8x8xbf16, #tpu.memory_space<vmem>>, vector<8x8xbf16>
    %c0_16 = arith.constant 0 : index
    %c0_17 = arith.constant 0 : index
    %13 = vector.load %arg9[%c0_16, %c0_17] : memref<8x1xf32, #tpu.memory_space<vmem>>, vector<8x1xf32>
    %c0_18 = arith.constant 0 : index
    %c0_19 = arith.constant 0 : index
    %14 = vector.load %arg10[%c0_18, %c0_19] : memref<8x8xbf16, #tpu.memory_space<vmem>>, vector<8x8xbf16>
    %c0_20 = arith.constant 0 : index
    %c0_21 = arith.constant 0 : index
    %15 = vector.load %arg11[%c0_20, %c0_21] : memref<8x1xf32, #tpu.memory_space<vmem>>, vector<8x1xf32>
    %c0_22 = arith.constant 0 : index
    %c0_23 = arith.constant 0 : index
    %16 = vector.load %arg12[%c0_22, %c0_23] : memref<8x8xbf16, #tpu.memory_space<vmem>>, vector<8x8xbf16>
    %c0_24 = arith.constant 0 : index
    %c0_25 = arith.constant 0 : index
    %17 = vector.load %arg13[%c0_24, %c0_25] : memref<8x1xf32, #tpu.memory_space<vmem>>, vector<8x1xf32>
    %18 = arith.truncf %7 : vector<8x256xf32> to vector<8x256xbf16>
    %19 = arith.truncf %9 : vector<8x256xf32> to vector<8x256xbf16>
    %cst_26 = arith.constant dense<0.000000e+00> : vector<8x256xf32>
    %20 = tpu.matmul %10, %5, %cst_26 {dimension_numbers = #tpu.dot_dimension_numbers<[1], [0], [0], [1], [0, 0, 1, 1], [], []>} : vector<8x8xbf16>, vector<8x256xbf16>, vector<8x256xf32> -> vector<8x256xf32>
    %cst_27 = arith.constant dense<0.000000e+00> : vector<8x256xf32>
    %21 = tpu.matmul %11, %18, %cst_27 {dimension_numbers = #tpu.dot_dimension_numbers<[1], [0], [0], [1], [0, 0, 1, 1], [], []>} : vector<8x8xbf16>, vector<8x256xbf16>, vector<8x256xf32> -> vector<8x256xf32>
    %22 = arith.addf %20, %21 : vector<8x256xf32>
    %cst_28 = arith.constant dense<0.000000e+00> : vector<8x256xf32>
    %23 = tpu.matmul %12, %19, %cst_28 {dimension_numbers = #tpu.dot_dimension_numbers<[1], [0], [0], [1], [0, 0, 1, 1], [], []>} : vector<8x8xbf16>, vector<8x256xbf16>, vector<8x256xf32> -> vector<8x256xf32>
    %24 = arith.addf %22, %23 : vector<8x256xf32>
    %25 = vector.broadcast %13 : vector<8x1xf32> to vector<8x256xf32>
    %26 = arith.addf %24, %25 : vector<8x256xf32>
    %cst_29 = arith.constant 0.000000e+00 : f32
    %27 = vector.broadcast %cst_29 : f32 to vector<8x256xf32>
    %28 = arith.maximumf %26, %27 : vector<8x256xf32>
    %29 = arith.truncf %28 : vector<8x256xf32> to vector<8x256xbf16>
    %cst_30 = arith.constant dense<0.000000e+00> : vector<8x256xf32>
    %30 = tpu.matmul %14, %29, %cst_30 {dimension_numbers = #tpu.dot_dimension_numbers<[1], [0], [0], [1], [0, 0, 1, 1], [], []>} : vector<8x8xbf16>, vector<8x256xbf16>, vector<8x256xf32> -> vector<8x256xf32>
    %31 = vector.broadcast %15 : vector<8x1xf32> to vector<8x256xf32>
    %32 = arith.addf %30, %31 : vector<8x256xf32>
    %33 = arith.truncf %32 : vector<8x256xf32> to vector<8x256xbf16>
    %cst_31 = arith.constant dense<0.000000e+00> : vector<8x256xf32>
    %34 = tpu.matmul %16, %33, %cst_31 {dimension_numbers = #tpu.dot_dimension_numbers<[1], [0], [0], [1], [0, 0, 1, 1], [], []>} : vector<8x8xbf16>, vector<8x256xbf16>, vector<8x256xf32> -> vector<8x256xf32>
    %35 = vector.broadcast %17 : vector<8x1xf32> to vector<8x256xf32>
    %36 = arith.addf %34, %35 : vector<8x256xf32>
    %cst_32 = arith.constant 0.000000e+00 : f32
    %37 = vector.broadcast %cst_32 : f32 to vector<8x256xf32>
    %38 = arith.subf %37, %36 : vector<8x256xf32>
    %39 = math.exp %38 : vector<8x256xf32>
    %cst_33 = arith.constant 1.000000e+00 : f32
    %40 = vector.broadcast %cst_33 : f32 to vector<8x256xf32>
    %41 = arith.addf %40, %39 : vector<8x256xf32>
    %cst_34 = arith.constant 1.000000e+00 : f32
    %42 = vector.broadcast %cst_34 : f32 to vector<8x256xf32>
    %43 = arith.divf %42, %41 : vector<8x256xf32>
    %44 = arith.subf %7, %9 : vector<8x256xf32>
    %45 = arith.mulf %43, %44 : vector<8x256xf32>
    %46 = arith.addf %9, %45 : vector<8x256xf32>
    %c0_35 = arith.constant 0 : index
    %c0_36 = arith.constant 0 : index
    %c0_37 = arith.constant 0 : index
    %47 = vector.load %arg14[%c0_35, %c0_36, %c0_37] : memref<1x8x256xf32, #tpu.memory_space<vmem>>, vector<1x8x256xf32>
    %48 = vector.shape_cast %47 : vector<1x8x256xf32> to vector<8x256xf32>
    %49 = vector.shape_cast %46 : vector<8x256xf32> to vector<1x8x256xf32>
    tpu.vector_store %arg14[%c0_35, %c0_36, %c0_37], %49 {strides = array<i32>} : memref<1x8x256xf32, #tpu.memory_space<vmem>>, vector<1x8x256xf32>,
    return
  }
  func.func @transform_0(%arg0: i32, %arg1: i32) -> (i32, i32, i32) {
    %c0_i32 = arith.constant 0 : i32
    %c0_i32_0 = arith.constant 0 : i32
    %c0_i32_1 = arith.constant 0 : i32
    return %arg0, %c0_i32, %c0_i32_0 : i32, i32, i32
  }
  func.func @transform_1(%arg0: i32, %arg1: i32) -> (i32, i32) {
    %c0_i32 = arith.constant 0 : i32
    %c0_i32_0 = arith.constant 0 : i32
    return %c0_i32, %arg1 : i32, i32
  }
  func.func @transform_2(%arg0: i32, %arg1: i32) -> (i32, i32, i32) {
    %c0_i32 = arith.constant 0 : i32
    %c0_i32_0 = arith.constant 0 : i32
    return %arg0, %c0_i32, %arg1 : i32, i32, i32
  }
  func.func @transform_3(%arg0: i32, %arg1: i32) -> (i32, i32, i32) {
    %c0_i32 = arith.constant 0 : i32
    %c0_i32_0 = arith.constant 0 : i32
    return %arg0, %c0_i32, %arg1 : i32, i32, i32
  }
  func.func @transform_4(%arg0: i32, %arg1: i32) -> (i32, i32) {
    %c0_i32 = arith.constant 0 : i32
    %c0_i32_0 = arith.constant 0 : i32
    %c0_i32_1 = arith.constant 0 : i32
    return %c0_i32, %c0_i32_0 : i32, i32
  }
  func.func @transform_5(%arg0: i32, %arg1: i32) -> (i32, i32) {
    %c0_i32 = arith.constant 0 : i32
    %c0_i32_0 = arith.constant 0 : i32
    %c0_i32_1 = arith.constant 0 : i32
    return %c0_i32, %c0_i32_0 : i32, i32
  }
  func.func @transform_6(%arg0: i32, %arg1: i32) -> (i32, i32) {
    %c0_i32 = arith.constant 0 : i32
    %c0_i32_0 = arith.constant 0 : i32
    %c0_i32_1 = arith.constant 0 : i32
    return %c0_i32, %c0_i32_0 : i32, i32
  }
  func.func @transform_7(%arg0: i32, %arg1: i32) -> (i32, i32) {
    %c0_i32 = arith.constant 0 : i32
    %c0_i32_0 = arith.constant 0 : i32
    %c0_i32_1 = arith.constant 0 : i32
    return %c0_i32, %c0_i32_0 : i32, i32
  }
  func.func @transform_8(%arg0: i32, %arg1: i32) -> (i32, i32) {
    %c0_i32 = arith.constant 0 : i32
    %c0_i32_0 = arith.constant 0 : i32
    %c0_i32_1 = arith.constant 0 : i32
    return %c0_i32, %c0_i32_0 : i32, i32
  }
  func.func @transform_9(%arg0: i32, %arg1: i32) -> (i32, i32) {
    %c0_i32 = arith.constant 0 : i32
    %c0_i32_0 = arith.constant 0 : i32
    %c0_i32_1 = arith.constant 0 : i32
    return %c0_i32, %c0_i32_0 : i32, i32
  }
  func.func @transform_10(%arg0: i32, %arg1: i32) -> (i32, i32) {
    %c0_i32 = arith.constant 0 : i32
    %c0_i32_0 = arith.constant 0 : i32
    %c0_i32_1 = arith.constant 0 : i32
    return %c0_i32, %c0_i32_0 : i32, i32
  }
  func.func @transform_11(%arg0: i32, %arg1: i32) -> (i32, i32) {
    %c0_i32 = arith.constant 0 : i32
    %c0_i32_0 = arith.constant 0 : i32
    %c0_i32_1 = arith.constant 0 : i32
    return %c0_i32, %c0_i32_0 : i32, i32
  }
  func.func @transform_12(%arg0: i32, %arg1: i32) -> (i32, i32, i32) {
    %c0_i32 = arith.constant 0 : i32
    %c0_i32_0 = arith.constant 0 : i32
    return %arg0, %c0_i32, %arg1 : i32, i32, i32
  }
}

</mosaic_0001>

<llo_original>
// kernel: tpu_custom_call.1
$region0: #{tpu_custom_call.1}
  #allocation0 [shape = 'u32[]', space=smem, size = 0x4, offset = 0x4, fixed_abs, tag = 'smem constant byte address 0x4 - core index']
  #allocation1 [shape = 'u32[144,128]{1,0:T(1,128)}', space=vmem, size = 0x12000, scoped, tag = 'internal scratch']
  %s0 = inlined_call_operand.hbm [shape: f32[4,8,16], index: 0, kind: input, shape index: {}]
  %s1 = inlined_call_operand.vmem [shape: bf16[16,256], index: 1, kind: input, shape index: {}]
  %s2 = inlined_call_operand.hbm [shape: f32[4,8,256], index: 2, kind: input, shape index: {}]
  %s3 = inlined_call_operand.hbm [shape: f32[4,8,256], index: 3, kind: input, shape index: {}]
  %s4 = inlined_call_operand.vmem [shape: bf16[8,8], index: 4, kind: input, shape index: {}]
  %s5 = inlined_call_operand.vmem [shape: bf16[8,8], index: 5, kind: input, shape index: {}]
  %s6 = inlined_call_operand.vmem [shape: bf16[8,8], index: 6, kind: input, shape index: {}]
  %s7 = inlined_call_operand.vmem [shape: f32[8,1], index: 7, kind: input, shape index: {}]
  %s8 = inlined_call_operand.vmem [shape: bf16[8,8], index: 8, kind: input, shape index: {}]
  %s9 = inlined_call_operand.vmem [shape: f32[8,1], index: 9, kind: input, shape index: {}]
  %s10 = inlined_call_operand.vmem [shape: bf16[8,8], index: 10, kind: input, shape index: {}]
  %s11 = inlined_call_operand.vmem [shape: f32[8,1], index: 11, kind: input, shape index: {}]
  %s12 = inlined_call_operand.hbm [shape: f32[4,8,256], index: 12, kind: output, shape index: {}]
  %s13 = sld [smem:[#allocation0]]
  $region93: #{tpu_custom_call.1} parent=0
    _
  %s15 = ssub.s32 1, %s13
  %s16 = scalar_select 0, %s15, %s13
  $region1: #{tpu_custom_call.1} parent=0
    #allocation2 [shape = 'u8[8192]{0}', space=vmem, size = 0x2000, scoped, tag = 'input window, operand 0']
    #allocation3 [shape = 's32[2]{0}', space=sflag, size = 0x8, scoped, tag = 'scoped memory for tpu_custom_call.1']
    #allocation4 [shape = 's32[2]{0}', space=sflag, size = 0x8, scoped, tag = 'scoped memory for tpu_custom_call.1']
    #allocation5 [shape = 'u8[16384]{0}', space=vmem, size = 0x4000, scoped, tag = 'input window, operand 2']
    #allocation6 [shape = 's32[2]{0}', space=sflag, size = 0x8, scoped, tag = 'scoped memory for tpu_custom_call.1']
    #allocation7 [shape = 'u8[16384]{0}', space=vmem, size = 0x4000, scoped, tag = 'input window, operand 3']
    #allocation8 [shape = 'u8[16384]{0}', space=vmem, size = 0x4000, scoped, tag = 'output window, operand 0']
    %17 = vsyncpa [#allocation3], 0
    %s18 = scalar_lea.sflag [#allocation3], 1
    %19 = vsyncpa %s18, 0
    %20 = vsyncpa [#allocation6], 0
    %s21 = scalar_lea.sflag [#allocation6], 1
    %22 = vsyncpa %s21, 0
    %23 = vsyncpa [#allocation4], 0
    %s24 = scalar_lea.sflag [#allocation4], 1
    %25 = vsyncpa %s24, 0
    loop: start=0, step=1, limit=6
    $region2: #{tpu_custom_call.1} parent=1 // loop_pre_header
      _
    $region3: #{tpu_custom_call.1} parent=1 // loop_header
      %s27 = sphi 0, %s31
      %p28 = scmp.ge.s32.totalorder %s27, 6
      %s34 = sphi 0, %s46
      %s35 = sphi 0, %s42
      %s36 = sphi 0, %s34
      %s37 = sphi 0, %s35
      %s38 = sphi 0, %s36
      %s39 = sphi 0, %s37
      %s49 = sphi 0, %s51
      %s52 = sphi 0, %s49
      %s53 = sphi 0, %s52
      %s69 = sphi 0, %s53
      %s75 = sphi 0, %s77
      %s78 = sphi 0, %s75
      %s79 = sphi 0, %s78
      %s95 = sphi 0, %s79
      %s103 = sphi 0, %s105
      %s106 = sphi 0, %s103
      %s107 = sphi 0, %s106
      %s123 = sphi 0, %s107
      %s131 = sphi 0, %s133
      %s134 = sphi 0, %s131
      %s135 = sphi 0, %s134
      %s151 = sphi 0, %s135
      %s155 = sphi 0, %s155
      %s157 = sphi 0, %s155
      %s158 = sphi 0, %s157
      %s172 = sphi 0, %s158
      %s176 = sphi 0, %s176
      %s178 = sphi 0, %s176
      %s179 = sphi 0, %s178
      %s193 = sphi 0, %s179
      %s197 = sphi 0, %s197
      %s199 = sphi 0, %s197
      %s200 = sphi 0, %s199
      %s214 = sphi 0, %s200
      %s218 = sphi 0, %s218
      %s220 = sphi 0, %s218
      %s221 = sphi 0, %s220
      %s235 = sphi 0, %s221
      %s239 = sphi 0, %s239
      %s241 = sphi 0, %s239
      %s242 = sphi 0, %s241
      %s256 = sphi 0, %s242
      %s260 = sphi 0, %s260
      %s262 = sphi 0, %s260
      %s263 = sphi 0, %s262
      %s277 = sphi 0, %s263
      %s281 = sphi 0, %s281
      %s283 = sphi 0, %s281
      %s284 = sphi 0, %s283
      %s298 = sphi 0, %s284
      %s302 = sphi 0, %s302
      %s304 = sphi 0, %s302
      %s305 = sphi 0, %s304
      %s319 = sphi 0, %s305
      %s327 = sphi 0, %s329
      %s330 = sphi 0, %s327
      %s331 = sphi 0, %s330
      %s347 = sphi 0, %s331
    $region4: #{tpu_custom_call.1} parent=1 // loop_header_branch
      %30 = sbr.rel (%p28) target = $region8
    $region5: #{tpu_custom_call.1} parent=1 // loop_body
      %s32 = ssub.s32 %s27, 1
      %s33 = ssub.s32 %s27, 2
      %s40 = sadd.s32 1, %s35
      %p41 = scmp.ge.s32.totalorder %s40, 1
      %s42 = scalar_select %p41, 0, %s40
      %s43 = sadd.s32 1, %s34
      %s44 = scalar_select %p41, %s43, %s34
      %p45 = scmp.ge.s32.totalorder %s44, 4
      %s46 = scalar_select %p45, 0, %s44
      %s47 = ssub.s32 %s34, %s46
      %p48 = scmp.eq.s32.totalorder %s47, 0
      %s50 = sadd.s32 %s49, 1
      %s51 = scalar_select %p48, %s49, %s50
      %p54 = pneg %p48
      %p55 = scmp.eq.s32.totalorder %s27, 3
      %p56 = por %p54, %p55
      %p57 = scmp.ne.s32.totalorder %s49, %s52
      %p58 = scmp.eq.s32.totalorder %s27, 0
      %p59 = por %p57, %p58
      %p60 = scmp.ne.s32.totalorder %s49, %s52
      %p61 = scmp.eq.s32.totalorder %s32, 3
      %p62 = por %p60, %p61
      %p63 = scmp.ne.s32.totalorder %s52, %s53
      %p64 = scmp.eq.s32.totalorder %s32, 0
      %p65 = por %p63, %p64
      %p66 = scmp.ne.s32.totalorder %s52, %s53
      %p67 = scmp.eq.s32.totalorder %s33, 3
      %p68 = por %p66, %p67
      %p70 = scmp.ne.s32.totalorder %s53, %s69
      %p71 = scmp.eq.s32.totalorder %s33, 0
      %p72 = por %p70, %p71
      %s73 = ssub.s32 %s35, %s42
      %p74 = scmp.eq.s32.totalorder %s73, 0
      %s76 = sadd.s32 %s75, 1
      %s77 = scalar_select %p74, %s75, %s76
      %p80 = pneg %p74
      %p81 = scmp.eq.s32.totalorder %s27, 3
      %p82 = por %p80, %p81
      %p83 = scmp.ne.s32.totalorder %s75, %s78
      %p84 = scmp.eq.s32.totalorder %s27, 0
      %p85 = por %p83, %p84
      %p86 = scmp.ne.s32.totalorder %s75, %s78
      %p87 = scmp.eq.s32.totalorder %s32, 3
      %p88 = por %p86, %p87
      %p89 = scmp.ne.s32.totalorder %s78, %s79
      %p90 = scmp.eq.s32.totalorder %s32, 0
      %p91 = por %p89, %p90
      %p92 = scmp.ne.s32.totalorder %s78, %s79
      %p93 = scmp.eq.s32.totalorder %s33, 3
      %p94 = por %p92, %p93
      %p96 = scmp.ne.s32.totalorder %s79, %s95
      %p97 = scmp.eq.s32.totalorder %s33, 0
      %p98 = por %p96, %p97
      %s99 = ssub.s32 %s34, %s46
      %s100 = ssub.s32 %s35, %s42
      %s101 = sor.u32 %s99, %s100
      %p102 = scmp.eq.s32.totalorder %s101, 0
      %s104 = sadd.s32 %s103, 1
      %s105 = scalar_select %p102, %s103, %s104
      %p108 = pneg %p102
      %p109 = scmp.eq.s32.totalorder %s27, 3
      %p110 = por %p108, %p109
      %p111 = scmp.ne.s32.totalorder %s103, %s106
      %p112 = scmp.eq.s32.totalorder %s27, 0
      %p113 = por %p111, %p112
      %p114 = scmp.ne.s32.totalorder %s103, %s106
      %p115 = scmp.eq.s32.totalorder %s32, 3
      %p116 = por %p114, %p115
      %p117 = scmp.ne.s32.totalorder %s106, %s107
      %p118 = scmp.eq.s32.totalorder %s32, 0
      %p119 = por %p117, %p118
      %p120 = scmp.ne.s32.totalorder %s106, %s107
      %p121 = scmp.eq.s32.totalorder %s33, 3
      %p122 = por %p120, %p121
      %p124 = scmp.ne.s32.totalorder %s107, %s123
      %p125 = scmp.eq.s32.totalorder %s33, 0
      %p126 = por %p124, %p125
      %s127 = ssub.s32 %s34, %s46
      %s128 = ssub.s32 %s35, %s42
      %s129 = sor.u32 %s127, %s128
      %p130 = scmp.eq.s32.totalorder %s129, 0
      %s132 = sadd.s32 %s131, 1
      %s133 = scalar_select %p130, %s131, %s132
      %p136 = pneg %p130
      %p137 = scmp.eq.s32.totalorder %s27, 3
      %p138 = por %p136, %p137
      %p139 = scmp.ne.s32.totalorder %s131, %s134
      %p140 = scmp.eq.s32.totalorder %s27, 0
      %p141 = por %p139, %p140
      %p142 = scmp.ne.s32.totalorder %s131, %s134
      %p143 = scmp.eq.s32.totalorder %s32, 3
      %p144 = por %p142, %p143
      %p145 = scmp.ne.s32.totalorder %s134, %s135
      %p146 = scmp.eq.s32.totalorder %s32, 0
      %p147 = por %p145, %p146
      %p148 = scmp.ne.s32.totalorder %s134, %s135
      %p149 = scmp.eq.s32.totalorder %s33, 3
      %p150 = por %p148, %p149
      %p152 = scmp.ne.s32.totalorder %s135, %s151
      %p153 = scmp.eq.s32.totalorder %s33, 0
      %p154 = por %p152, %p153
      %s156 = sadd.s32 %s155, 1
      %p159 = scmp.eq.s32.totalorder %s27, 3
      %p160 = scmp.ne.s32.totalorder %s155, %s157
      %p161 = scmp.eq.s32.totalorder %s27, 0
      %p162 = por %p160, %p161
      %p163 = scmp.ne.s32.totalorder %s155, %s157
      %p164 = scmp.eq.s32.totalorder %s32, 3
      %p165 = por %p163, %p164
      %p166 = scmp.ne.s32.totalorder %s157, %s158
      %p167 = scmp.eq.s32.totalorder %s32, 0
      %p168 = por %p166, %p167
      %p169 = scmp.ne.s32.totalorder %s157, %s158
      %p170 = scmp.eq.s32.totalorder %s33, 3
      %p171 = por %p169, %p170
      %p173 = scmp.ne.s32.totalorder %s158, %s172
      %p174 = scmp.eq.s32.totalorder %s33, 0
      %p175 = por %p173, %p174
      %s177 = sadd.s32 %s176, 1
      %p180 = scmp.eq.s32.totalorder %s27, 3
      %p181 = scmp.ne.s32.totalorder %s176, %s178
      %p182 = scmp.eq.s32.totalorder %s27, 0
      %p183 = por %p181, %p182
      %p184 = scmp.ne.s32.totalorder %s176, %s178
      %p185 = scmp.eq.s32.totalorder %s32, 3
      %p186 = por %p184, %p185
      %p187 = scmp.ne.s32.totalorder %s178, %s179
      %p188 = scmp.eq.s32.totalorder %s32, 0
      %p189 = por %p187, %p188
      %p190 = scmp.ne.s32.totalorder %s178, %s179
      %p191 = scmp.eq.s32.totalorder %s33, 3
      %p192 = por %p190, %p191
      %p194 = scmp.ne.s32.totalorder %s179, %s193
      %p195 = scmp.eq.s32.totalorder %s33, 0
      %p196 = por %p194, %p195
      %s198 = sadd.s32 %s197, 1
      %p201 = scmp.eq.s32.totalorder %s27, 3
      %p202 = scmp.ne.s32.totalorder %s197, %s199
      %p203 = scmp.eq.s32.totalorder %s27, 0
      %p204 = por %p202, %p203
      %p205 = scmp.ne.s32.totalorder %s197, %s199
      %p206 = scmp.eq.s32.totalorder %s32, 3
      %p207 = por %p205, %p206
      %p208 = scmp.ne.s32.totalorder %s199, %s200
      %p209 = scmp.eq.s32.totalorder %s32, 0
      %p210 = por %p208, %p209
      %p211 = scmp.ne.s32.totalorder %s199, %s200
      %p212 = scmp.eq.s32.totalorder %s33, 3
      %p213 = por %p211, %p212
      %p215 = scmp.ne.s32.totalorder %s200, %s214
      %p216 = scmp.eq.s32.totalorder %s33, 0
      %p217 = por %p215, %p216
      %s219 = sadd.s32 %s218, 1
      %p222 = scmp.eq.s32.totalorder %s27, 3
      %p223 = scmp.ne.s32.totalorder %s218, %s220
      %p224 = scmp.eq.s32.totalorder %s27, 0
      %p225 = por %p223, %p224
      %p226 = scmp.ne.s32.totalorder %s218, %s220
      %p227 = scmp.eq.s32.totalorder %s32, 3
      %p228 = por %p226, %p227
      %p229 = scmp.ne.s32.totalorder %s220, %s221
      %p230 = scmp.eq.s32.totalorder %s32, 0
      %p231 = por %p229, %p230
      %p232 = scmp.ne.s32.totalorder %s220, %s221
      %p233 = scmp.eq.s32.totalorder %s33, 3
      %p234 = por %p232, %p233
      %p236 = scmp.ne.s32.totalorder %s221, %s235
      %p237 = scmp.eq.s32.totalorder %s33, 0
      %p238 = por %p236, %p237
      %s240 = sadd.s32 %s239, 1
      %p243 = scmp.eq.s32.totalorder %s27, 3
      %p244 = scmp.ne.s32.totalorder %s239, %s241
      %p245 = scmp.eq.s32.totalorder %s27, 0
      %p246 = por %p244, %p245
      %p247 = scmp.ne.s32.totalorder %s239, %s241
      %p248 = scmp.eq.s32.totalorder %s32, 3
      %p249 = por %p247, %p248
      %p250 = scmp.ne.s32.totalorder %s241, %s242
      %p251 = scmp.eq.s32.totalorder %s32, 0
      %p252 = por %p250, %p251
      %p253 = scmp.ne.s32.totalorder %s241, %s242
      %p254 = scmp.eq.s32.totalorder %s33, 3
      %p255 = por %p253, %p254
      %p257 = scmp.ne.s32.totalorder %s242, %s256
      %p258 = scmp.eq.s32.totalorder %s33, 0
      %p259 = por %p257, %p258
      %s261 = sadd.s32 %s260, 1
      %p264 = scmp.eq.s32.totalorder %s27, 3
      %p265 = scmp.ne.s32.totalorder %s260, %s262
      %p266 = scmp.eq.s32.totalorder %s27, 0
      %p267 = por %p265, %p266
      %p268 = scmp.ne.s32.totalorder %s260, %s262
      %p269 = scmp.eq.s32.totalorder %s32, 3
      %p270 = por %p268, %p269
      %p271 = scmp.ne.s32.totalorder %s262, %s263
      %p272 = scmp.eq.s32.totalorder %s32, 0
      %p273 = por %p271, %p272
      %p274 = scmp.ne.s32.totalorder %s262, %s263
      %p275 = scmp.eq.s32.totalorder %s33, 3
      %p276 = por %p274, %p275
      %p278 = scmp.ne.s32.totalorder %s263, %s277
      %p279 = scmp.eq.s32.totalorder %s33, 0
      %p280 = por %p278, %p279
      %s282 = sadd.s32 %s281, 1
      %p285 = scmp.eq.s32.totalorder %s27, 3
      %p286 = scmp.ne.s32.totalorder %s281, %s283
      %p287 = scmp.eq.s32.totalorder %s27, 0
      %p288 = por %p286, %p287
      %p289 = scmp.ne.s32.totalorder %s281, %s283
      %p290 = scmp.eq.s32.totalorder %s32, 3
      %p291 = por %p289, %p290
      %p292 = scmp.ne.s32.totalorder %s283, %s284
      %p293 = scmp.eq.s32.totalorder %s32, 0
      %p294 = por %p292, %p293
      %p295 = scmp.ne.s32.totalorder %s283, %s284
      %p296 = scmp.eq.s32.totalorder %s33, 3
      %p297 = por %p295, %p296
      %p299 = scmp.ne.s32.totalorder %s284, %s298
      %p300 = scmp.eq.s32.totalorder %s33, 0
      %p301 = por %p299, %p300
      %s303 = sadd.s32 %s302, 1
      %p306 = scmp.eq.s32.totalorder %s27, 3
      %p307 = scmp.ne.s32.totalorder %s302, %s304
      %p308 = scmp.eq.s32.totalorder %s27, 0
      %p309 = por %p307, %p308
      %p310 = scmp.ne.s32.totalorder %s302, %s304
      %p311 = scmp.eq.s32.totalorder %s32, 3
      %p312 = por %p310, %p311
      %p313 = scmp.ne.s32.totalorder %s304, %s305
      %p314 = scmp.eq.s32.totalorder %s32, 0
      %p315 = por %p313, %p314
      %p316 = scmp.ne.s32.totalorder %s304, %s305
      %p317 = scmp.eq.s32.totalorder %s33, 3
      %p318 = por %p316, %p317
      %p320 = scmp.ne.s32.totalorder %s305, %s319
      %p321 = scmp.eq.s32.totalorder %s33, 0
      %p322 = por %p320, %p321
      %s323 = ssub.s32 %s34, %s46
      %s324 = ssub.s32 %s35, %s42
      %s325 = sor.u32 %s323, %s324
      %p326 = scmp.eq.s32.totalorder %s325, 0
      %s328 = sadd.s32 %s327, 1
      %s329 = scalar_select %p326, %s327, %s328
      %p332 = pneg %p326
      %p333 = scmp.eq.s32.totalorder %s27, 3
      %p334 = por %p332, %p333
      %p335 = scmp.ne.s32.totalorder %s327, %s330
      %p336 = scmp.eq.s32.totalorder %s27, 0
      %p337 = por %p335, %p336
      %p338 = scmp.ne.s32.totalorder %s327, %s330
      %p339 = scmp.eq.s32.totalorder %s32, 3
      %p340 = por %p338, %p339
      %p341 = scmp.ne.s32.totalorder %s330, %s331
      %p342 = scmp.eq.s32.totalorder %s32, 0
      %p343 = por %p341, %p342
      %p344 = scmp.ne.s32.totalorder %s330, %s331
      %p345 = scmp.eq.s32.totalorder %s33, 3
      %p346 = por %p344, %p345
      %p348 = scmp.ne.s32.totalorder %s331, %s347
      %p349 = scmp.eq.s32.totalorder %s33, 0
      %p350 = por %p348, %p349
      %p351 = scmp.le.s32.totalorder 1, %s27
      %p352 = scmp.lt.s32.totalorder %s27, 5
      %p353 = pnand %p351, %p352
      %p354 = pneg %p353
      // Predicated region
      $region9: #{tpu_custom_call.1} parent=5 // pred_check
        _
      $region10: #{tpu_custom_call.1} parent=5 // pred_check_branch
        %356 = sbr.rel (%p353) target = $region12
      $region11: #{tpu_custom_call.1} parent=5 // pred_region
        %s357 = ssub.s32 %s27, 1
        // Predicated region
        $region13: #{tpu_custom_call.1} parent=11 // pred_check
          %p358 = pneg %p91
        $region14: #{tpu_custom_call.1} parent=11 // pred_check_branch
          %360 = sbr.rel (%p358) target = $region16
        $region15: #{tpu_custom_call.1} parent=11 // pred_region
          %s361 = smul.u32 2, %s37
          %p362 = scmp.lt.s32.totalorder %s361, 1
          %s363 = scalar_select %p362, %s361, 1
          %s364 = smul.addr %s363, 4
          %s365 = scalar_lea.vmem %s1, %s364
          %s366 = smul.u32 2, %s37
        $region16: #{tpu_custom_call.1} parent=11 // pred_fallthru
          _
        // Predicated region
        $region17: #{tpu_custom_call.1} parent=11 // pred_check
          %p367 = pneg %p168
        $region18: #{tpu_custom_call.1} parent=11 // pred_check_branch
          %369 = sbr.rel (%p367) target = $region20
        $region19: #{tpu_custom_call.1} parent=11 // pred_region
          _
        $region20: #{tpu_custom_call.1} parent=11 // pred_fallthru
          _
        // Predicated region
        $region21: #{tpu_custom_call.1} parent=11 // pred_check
          %p370 = pneg %p189
        $region22: #{tpu_custom_call.1} parent=11 // pred_check_branch
          %372 = sbr.rel (%p370) target = $region24
        $region23: #{tpu_custom_call.1} parent=11 // pred_region
          _
        $region24: #{tpu_custom_call.1} parent=11 // pred_fallthru
          _
        // Predicated region
        $region25: #{tpu_custom_call.1} parent=11 // pred_check
          %p373 = pneg %p210
        $region26: #{tpu_custom_call.1} parent=11 // pred_check_branch
          %375 = sbr.rel (%p373) target = $region28
        $region27: #{tpu_custom_call.1} parent=11 // pred_region
          _
        $region28: #{tpu_custom_call.1} parent=11 // pred_fallthru
          _
        // Predicated region
        $region29: #{tpu_custom_call.1} parent=11 // pred_check
          %p376 = pneg %p231
        $region30: #{tpu_custom_call.1} parent=11 // pred_check_branch
          %378 = sbr.rel (%p376) target = $region32
        $region31: #{tpu_custom_call.1} parent=11 // pred_region
          _
        $region32: #{tpu_custom_call.1} parent=11 // pred_fallthru
          _
        // Predicated region
        $region33: #{tpu_custom_call.1} parent=11 // pred_check
          %p379 = pneg %p252
        $region34: #{tpu_custom_call.1} parent=11 // pred_check_branch
          %381 = sbr.rel (%p379) target = $region36
        $region35: #{tpu_custom_call.1} parent=11 // pred_region
          _
        $region36: #{tpu_custom_call.1} parent=11 // pred_fallthru
          _
        // Predicated region
        $region37: #{tpu_custom_call.1} parent=11 // pred_check
          %p382 = pneg %p273
        $region38: #{tpu_custom_call.1} parent=11 // pred_check_branch
          %384 = sbr.rel (%p382) target = $region40
        $region39: #{tpu_custom_call.1} parent=11 // pred_region
          _
        $region40: #{tpu_custom_call.1} parent=11 // pred_fallthru
          _
        // Predicated region
        $region41: #{tpu_custom_call.1} parent=11 // pred_check
          %p385 = pneg %p294
        $region42: #{tpu_custom_call.1} parent=11 // pred_check_branch
          %387 = sbr.rel (%p385) target = $region44
        $region43: #{tpu_custom_call.1} parent=11 // pred_region
          _
        $region44: #{tpu_custom_call.1} parent=11 // pred_fallthru
          _
        // Predicated region
        $region45: #{tpu_custom_call.1} parent=11 // pred_check
          %p388 = pneg %p315
        $region46: #{tpu_custom_call.1} parent=11 // pred_check_branch
          %390 = sbr.rel (%p388) target = $region48
        $region47: #{tpu_custom_call.1} parent=11 // pred_region
          _
        $region48: #{tpu_custom_call.1} parent=11 // pred_fallthru
          _
      $region12: #{tpu_custom_call.1} parent=5 // pred_fallthru
        _
      %p391 = scmp.lt.s32.totalorder %s27, 4
      // Predicated region
      $region49: #{tpu_custom_call.1} parent=5 // pred_check
        %p392 = pneg %p391
      $region50: #{tpu_custom_call.1} parent=5 // pred_check_branch
        %394 = sbr.rel (%p392) target = $region52
      $region51: #{tpu_custom_call.1} parent=5 // pred_region
        // Predicated region
        $region53: #{tpu_custom_call.1} parent=51 // pred_check
          %p395 = pneg %p59
        $region54: #{tpu_custom_call.1} parent=51 // pred_check_branch
          %397 = sbr.rel (%p395) target = $region56
        $region55: #{tpu_custom_call.1} parent=51 // pred_region
          %s398 = sand.u32 %s49, 1
          %s399 = scalar_lea.sflag [#allocation3], %s398
          %s400 = sand.u32 %s49, 1
          %s401 = smul.addr %s400, 8
          %s402 = scalar_lea.vmem [#allocation2], %s401
          %s404 = ssub.s32 128, 128
          %405 = vsyncadd %s399, %s404
          %s406 = smul.addr %s34, 128
          %s407 = scalar_lea.hbm %s0, %s406
          %s409 = sshll.u32 %s402, 4
          %s410 = int_to_ptr.vmem [resolvable:$true] %s409
          %412 = dma.hbm_to_vmem [thread:$0]  %s407, 128, %s410, %s399
        $region56: #{tpu_custom_call.1} parent=51 // pred_fallthru
          _
        // Predicated region
        $region57: #{tpu_custom_call.1} parent=51 // pred_check
          %p413 = pneg %p113
        $region58: #{tpu_custom_call.1} parent=51 // pred_check_branch
          %415 = sbr.rel (%p413) target = $region60
        $region59: #{tpu_custom_call.1} parent=51 // pred_region
          %s416 = sand.u32 %s27, 1
          %s417 = scalar_lea.sflag [#allocation6], %s416
          %s418 = sand.u32 %s103, 1
          %s419 = smul.addr %s418, 16
          %s420 = scalar_lea.vmem [#allocation5], %s419
          %s421 = smul.u32 2, %s35
          %s423 = ssub.s32 256, 256
          %424 = vsyncadd %s417, %s423
          %s425 = smul.addr %s34, 2
          %s426 = sadd.s32 %s421, %s425
          %s427 = smul.addr %s426, 128
          %s428 = scalar_lea.hbm %s2, %s427
          %s430 = sshll.u32 %s420, 4
          %s431 = int_to_ptr.vmem [resolvable:$true] %s430
          %433 = dma.hbm_to_vmem [thread:$0]  %s428, 256, %s431, %s417
        $region60: #{tpu_custom_call.1} parent=51 // pred_fallthru
          _
        // Predicated region
        $region61: #{tpu_custom_call.1} parent=51 // pred_check
          %p434 = pneg %p141
        $region62: #{tpu_custom_call.1} parent=51 // pred_check_branch
          %436 = sbr.rel (%p434) target = $region64
        $region63: #{tpu_custom_call.1} parent=51 // pred_region
          %s437 = sand.u32 %s27, 1
          %s438 = scalar_lea.sflag [#allocation6], %s437
          %s439 = sand.u32 %s131, 1
          %s440 = smul.addr %s439, 16
          %s441 = scalar_lea.vmem [#allocation7], %s440
          %s442 = smul.u32 2, %s35
          %s444 = ssub.s32 256, 256
          %445 = vsyncadd %s438, %s444
          %s446 = smul.addr %s34, 2
          %s447 = sadd.s32 %s442, %s446
          %s448 = smul.addr %s447, 128
          %s449 = scalar_lea.hbm %s3, %s448
          %s451 = sshll.u32 %s441, 4
          %s452 = int_to_ptr.vmem [resolvable:$true] %s451
          %454 = dma.hbm_to_vmem [thread:$0]  %s449, 256, %s452, %s438
        $region64: #{tpu_custom_call.1} parent=51 // pred_fallthru
          _
      $region52: #{tpu_custom_call.1} parent=5 // pred_fallthru
        _
      %p455 = scmp.le.s32.totalorder 1, %s27
      %p456 = scmp.lt.s32.totalorder %s27, 5
      %p457 = pnand %p455, %p456
      %p458 = pneg %p457
      // Predicated region
      $region65: #{tpu_custom_call.1} parent=5 // pred_check
        _
      $region66: #{tpu_custom_call.1} parent=5 // pred_check_branch
        %460 = sbr.rel (%p457) target = $region68
      $region67: #{tpu_custom_call.1} parent=5 // pred_region
        %s461 = ssub.s32 %s27, 1
        %s462 = sand.u32 %s52, 1
        %s463 = scalar_lea.sflag [#allocation3], %s462
        %s464 = sand.u32 %s52, 1
        %s465 = smul.addr %s464, 8
        %s466 = scalar_lea.vmem [#allocation2], %s465
        // Predicated region
        $region69: #{tpu_custom_call.1} parent=67 // pred_check
          %p467 = pneg %p65
        $region70: #{tpu_custom_call.1} parent=67 // pred_check_branch
          %469 = sbr.rel (%p467) target = $region72
        $region71: #{tpu_custom_call.1} parent=67 // pred_region
          %470 = dma.done %s463, 128
        $region72: #{tpu_custom_call.1} parent=67 // pred_fallthru
          _
        %s471 = sand.u32 %s32, 1
        %s472 = scalar_lea.sflag [#allocation6], %s471
        %s473 = sand.u32 %s106, 1
        %s474 = smul.addr %s473, 16
        %s475 = scalar_lea.vmem [#allocation5], %s474
        // Predicated region
        $region73: #{tpu_custom_call.1} parent=67 // pred_check
          %p476 = pneg %p119
        $region74: #{tpu_custom_call.1} parent=67 // pred_check_branch
          %478 = sbr.rel (%p476) target = $region76
        $region75: #{tpu_custom_call.1} parent=67 // pred_region
          %479 = dma.done %s472, 256
        $region76: #{tpu_custom_call.1} parent=67 // pred_fallthru
          _
        %s480 = sand.u32 %s32, 1
        %s481 = scalar_lea.sflag [#allocation6], %s480
        %s482 = sand.u32 %s134, 1
        %s483 = smul.addr %s482, 16
        %s484 = scalar_lea.vmem [#allocation7], %s483
        // Predicated region
        $region77: #{tpu_custom_call.1} parent=67 // pred_check
          %p485 = pneg %p147
        $region78: #{tpu_custom_call.1} parent=67 // pred_check_branch
          %487 = sbr.rel (%p485) target = $region80
        $region79: #{tpu_custom_call.1} parent=67 // pred_region
          %488 = dma.done %s481, 256
        $region80: #{tpu_custom_call.1} parent=67 // pred_fallthru
          _
        %s489 = sand.u32 %s52, 1
        %s490 = scalar_lea.sflag [#allocation3], %s489
        %s491 = sand.u32 %s52, 1
        %s492 = smul.addr %s491, 8
        %s493 = scalar_lea.vmem [#allocation2], %s492
        %p494 = pneg %p65
        %p495 = pneg %p62
        %s496 = smul.u32 2, %s37
        %p497 = scmp.lt.s32.totalorder %s496, 1
        %s498 = scalar_select %p497, %s496, 1
        %s499 = smul.addr %s498, 4
        %s500 = scalar_lea.vmem %s1, %s499
        %p501 = pneg %p91
        %p502 = pneg %p88
        %s503 = sand.u32 %s32, 1
        %s504 = scalar_lea.sflag [#allocation6], %s503
        %s505 = sand.u32 %s106, 1
        %s506 = smul.addr %s505, 16
        %s507 = scalar_lea.vmem [#allocation5], %s506
        %p508 = pneg %p119
        %p509 = pneg %p116
        %s510 = sand.u32 %s32, 1
        %s511 = scalar_lea.sflag [#allocation6], %s510
        %s512 = sand.u32 %s134, 1
        %s513 = smul.addr %s512, 16
        %s514 = scalar_lea.vmem [#allocation7], %s513
        %p515 = pneg %p147
        %p516 = pneg %p144
        %p517 = pneg %p168
        %p518 = pneg %p165
        %p519 = pneg %p189
        %p520 = pneg %p186
        %p521 = pneg %p210
        %p522 = pneg %p207
        %p523 = pneg %p231
        %p524 = pneg %p228
        %p525 = pneg %p252
        %p526 = pneg %p249
        %p527 = pneg %p273
        %p528 = pneg %p270
        %p529 = pneg %p294
        %p530 = pneg %p291
        %p531 = pneg %p315
        %p532 = pneg %p312
        %p533 = pneg %p343
        %p534 = pneg %p340
        %s535 = sand.u32 %s330, 1
        %s536 = scalar_lea.sflag [#allocation4], %s535
        %s537 = sand.u32 %s330, 1
        %s538 = smul.addr %s537, 16
        %s539 = scalar_lea.vmem [#allocation8], %s538
        %s540 = smul.u32 2, %s37
        %p541 = scmp.lt.s32.totalorder %s540, 1
        %s542 = scalar_select %p541, %s540, 1
        %s543 = smul.addr %s542, 4
        %s544 = scalar_lea.vmem %s1, %s543
        %s545 = smul.u32 2, %s37
        %s546 = smul.u32 2, %s37
        %s547 = smul.u32 2, %s37
        %s548 = smul.u32 2, %s37
        %v550 = vld [vmem:[%s466] sm:$0xff]
        %v551 = vpack.c.bf16 %v550, %v550
        %v552 = vld [vmem:[%s544] sm:$0xff]
        %v553 = vld [vmem:[%s544 + $0x8] sm:$0xff]
        %v556 = vunpack.c.l.b16 %v552
        %v557 = vunpack.c.h.b16 %v552
        %v558 = vunpack.c.l.b16 %v553
        %v559 = vunpack.c.h.b16 %v553
        %v560 = vpack.c.b16 %v558, %v556
        %v561 = vpack.c.b16 %v559, %v557
        %vm564 = vcmask 130048
        %v566 = vsel %vm564, %v551, 0
        %568 = vmatprep.subr.bf16.mxu0 %v561
        %569 = vmatpush1.bf16.msra.mxu0 %v560
        %570 = vmatprep.subr.bf16.mxu0 0
        %571 = vmatpush1.bf16.msra.mxu0 0
        %572 = vmatprep.subr.bf16.mxu0 0
        %573 = vmatpush1.bf16.msra.mxu0 0
        %574 = vmatprep.subr.bf16.mxu0 0
        %575 = vmatpush1.bf16.msra.mxu0 0
        %576 = vmatprep.subr.bf16.mxu0 0
        %577 = vmatpush1.bf16.msra.mxu0 0
        %578 = vmatprep.subr.bf16.mxu0 0
        %579 = vmatpush1.bf16.msra.mxu0 0
        %580 = vmatprep.subr.bf16.mxu0 0
        %581 = vmatpush1.bf16.msra.mxu0 0
        %582 = vmatprep.subr.bf16.mxu0 0
        %583 = vmatpush1.bf16.msra.mxu0 0
        %584 = vmatprep.subr.bf16.mxu0 0
        %585 = vmatpush1.bf16.msra.mxu0 0
        %586 = vmatprep.subr.bf16.mxu0 0
        %587 = vmatpush1.bf16.msra.mxu0 0
        %588 = vmatprep.subr.bf16.mxu0 0
        %589 = vmatpush1.bf16.msra.mxu0 0
        %590 = vmatprep.subr.bf16.mxu0 0
        %591 = vmatpush1.bf16.msra.mxu0 0
        %592 = vmatprep.subr.bf16.mxu0 0
        %593 = vmatpush1.bf16.msra.mxu0 0
        %594 = vmatprep.subr.bf16.mxu0 0
        %595 = vmatpush1.bf16.msra.mxu0 0
        %596 = vmatprep.subr.bf16.mxu0 0
        %597 = vmatpush1.bf16.msra.mxu0 0
        %598 = vmatprep.subr.bf16.mxu0 0
        %599 = vmatpush1.bf16.msra.mxu0 0
        %600 = vmatprep.mubr.bf16.mxu0 0
        %601 = vmatmul.mubr.bf16.gmra.mrb[0].mxu0 %v566
        %v602 = vpop.f32.mrb[0].mxu0
        %v603 = vadd.f32 0.0, %v602
        %v604 = vpop.f32.mrb[0].mxu0
        %v605 = vadd.f32 0.0, %v604
        %v606 = vpop.f32.mrb[0].mxu0
        %v607 = vpop.f32.mrb[0].mxu0
        %608 = vdwg.mxu0
        %v609 = vpack.c.bf16 %v603, %v603
        %v610 = vpack.c.bf16 %v605, %v605
        %v611 = vld [vmem:[%s475] sm:$0xff]
        %v612 = vld [vmem:[%s475 + $0x8] sm:$0xff]
        %v613 = vld [vmem:[%s484] sm:$0xff]
        %v614 = vld [vmem:[%s484 + $0x8] sm:$0xff]
        %v615 = vld [vmem:[%s4] sm:$0xf]
        %v616 = vld [vmem:[%s5] sm:$0xf]
        %v617 = vld [vmem:[%s6] sm:$0xf]
        %v618 = vld [vmem:[%s7] sm:$0xff]
        %v619 = vld [vmem:[%s8] sm:$0xf]
        %v620 = vld [vmem:[%s9] sm:$0xff]
        %v621 = vld [vmem:[%s10] sm:$0xf]
        %v622 = vld [vmem:[%s11] sm:$0xff]
        %v623 = vpack.c.bf16 %v611, %v611
        %v624 = vpack.c.bf16 %v612, %v612
        %v625 = vpack.c.bf16 %v613, %v613
        %v626 = vpack.c.bf16 %v614, %v614
        %vm627 = vcmask 64512
        %v629 = vsel %vm627, %v616, 0
        %vm631 = vcmask 1043456
        %v633 = vsel %vm631, %v623, 0
        %v636 = vsel %vm631, %v624, 0
        %638 = vmatprep.subr.bf16.mxu0 %v636
        %639 = vmatpush1.bf16.msra.mxu0 %v633
        %640 = vmatprep.subr.bf16.mxu0 0
        %641 = vmatpush1.bf16.msra.mxu0 0
        %642 = vmatprep.subr.bf16.mxu0 0
        %643 = vmatpush1.bf16.msra.mxu0 0
        %644 = vmatprep.subr.bf16.mxu0 0
        %645 = vmatpush1.bf16.msra.mxu0 0
        %646 = vmatprep.subr.bf16.mxu0 0
        %647 = vmatpush1.bf16.msra.mxu0 0
        %648 = vmatprep.subr.bf16.mxu0 0
        %649 = vmatpush1.bf16.msra.mxu0 0
        %650 = vmatprep.subr.bf16.mxu0 0
        %651 = vmatpush1.bf16.msra.mxu0 0
        %652 = vmatprep.subr.bf16.mxu0 0
        %653 = vmatpush1.bf16.msra.mxu0 0
        %654 = vmatprep.subr.bf16.mxu0 0
        %655 = vmatpush1.bf16.msra.mxu0 0
        %656 = vmatprep.subr.bf16.mxu0 0
        %657 = vmatpush1.bf16.msra.mxu0 0
        %658 = vmatprep.subr.bf16.mxu0 0
        %659 = vmatpush1.bf16.msra.mxu0 0
        %660 = vmatprep.subr.bf16.mxu0 0
        %661 = vmatpush1.bf16.msra.mxu0 0
        %662 = vmatprep.subr.bf16.mxu0 0
        %663 = vmatpush1.bf16.msra.mxu0 0
        %664 = vmatprep.subr.bf16.mxu0 0
        %665 = vmatpush1.bf16.msra.mxu0 0
        %666 = vmatprep.subr.bf16.mxu0 0
        %667 = vmatpush1.bf16.msra.mxu0 0
        %668 = vmatprep.subr.bf16.mxu0 0
        %669 = vmatpush1.bf16.msra.mxu0 0
        %670 = vmatprep.mubr.bf16.mxu0 0
        %671 = vmatmul.mubr.bf16.gmra.mrb[0].mxu0 %v629
        %v672 = vpop.f32.mrb[0].mxu0
        %v673 = vadd.f32 0.0, %v672
        %v674 = vpop.f32.mrb[0].mxu0
        %v675 = vadd.f32 0.0, %v674
        %v676 = vpop.f32.mrb[0].mxu0
        %v677 = vpop.f32.mrb[0].mxu0
        %678 = vdwg.mxu0
        %v680 = vsel %vm627, %v615, 0
        %v683 = vsel %vm631, %v609, 0
        %v686 = vsel %vm631, %v610, 0
        %688 = vmatprep.subr.bf16.mxu0 %v686
        %689 = vmatpush1.bf16.msra.mxu0 %v683
        %690 = vmatprep.subr.bf16.mxu0 0
        %691 = vmatpush1.bf16.msra.mxu0 0
        %692 = vmatprep.subr.bf16.mxu0 0
        %693 = vmatpush1.bf16.msra.mxu0 0
        %694 = vmatprep.subr.bf16.mxu0 0
        %695 = vmatpush1.bf16.msra.mxu0 0
        %696 = vmatprep.subr.bf16.mxu0 0
        %697 = vmatpush1.bf16.msra.mxu0 0
        %698 = vmatprep.subr.bf16.mxu0 0
        %699 = vmatpush1.bf16.msra.mxu0 0
        %700 = vmatprep.subr.bf16.mxu0 0
        %701 = vmatpush1.bf16.msra.mxu0 0
        %702 = vmatprep.subr.bf16.mxu0 0
        %703 = vmatpush1.bf16.msra.mxu0 0
        %704 = vmatprep.subr.bf16.mxu0 0
        %705 = vmatpush1.bf16.msra.mxu0 0
        %706 = vmatprep.subr.bf16.mxu0 0
        %707 = vmatpush1.bf16.msra.mxu0 0
        %708 = vmatprep.subr.bf16.mxu0 0
        %709 = vmatpush1.bf16.msra.mxu0 0
        %710 = vmatprep.subr.bf16.mxu0 0
        %711 = vmatpush1.bf16.msra.mxu0 0
        %712 = vmatprep.subr.bf16.mxu0 0
        %713 = vmatpush1.bf16.msra.mxu0 0
        %714 = vmatprep.subr.bf16.mxu0 0
        %715 = vmatpush1.bf16.msra.mxu0 0
        %716 = vmatprep.subr.bf16.mxu0 0
        %717 = vmatpush1.bf16.msra.mxu0 0
        %718 = vmatprep.subr.bf16.mxu0 0
        %719 = vmatpush1.bf16.msra.mxu0 0
        %720 = vmatprep.mubr.bf16.mxu0 0
        %721 = vmatmul.mubr.bf16.gmra.mrb[0].mxu0 %v680
        %v722 = vpop.f32.mrb[0].mxu0
        %v723 = vadd.f32 %v673, %v722
        %v724 = vpop.f32.mrb[0].mxu0
        %v725 = vadd.f32 %v675, %v724
        %v726 = vpop.f32.mrb[0].mxu0
        %v727 = vpop.f32.mrb[0].mxu0
        %728 = vdwg.mxu0
        %v730 = vsel %vm627, %v617, 0
        %v733 = vsel %vm631, %v625, 0
        %v736 = vsel %vm631, %v626, 0
        %738 = vmatprep.subr.bf16.mxu0 %v736
        %739 = vmatpush1.bf16.msra.mxu0 %v733
        %740 = vmatprep.subr.bf16.mxu0 0
        %741 = vmatpush1.bf16.msra.mxu0 0
        %742 = vmatprep.subr.bf16.mxu0 0
        %743 = vmatpush1.bf16.msra.mxu0 0
        %744 = vmatprep.subr.bf16.mxu0 0
        %745 = vmatpush1.bf16.msra.mxu0 0
        %746 = vmatprep.subr.bf16.mxu0 0
        %747 = vmatpush1.bf16.msra.mxu0 0
        %748 = vmatprep.subr.bf16.mxu0 0
        %749 = vmatpush1.bf16.msra.mxu0 0
        %750 = vmatprep.subr.bf16.mxu0 0
        %751 = vmatpush1.bf16.msra.mxu0 0
        %752 = vmatprep.subr.bf16.mxu0 0
        %753 = vmatpush1.bf16.msra.mxu0 0
        %754 = vmatprep.subr.bf16.mxu0 0
        %755 = vmatpush1.bf16.msra.mxu0 0
        %756 = vmatprep.subr.bf16.mxu0 0
        %757 = vmatpush1.bf16.msra.mxu0 0
        %758 = vmatprep.subr.bf16.mxu0 0
        %759 = vmatpush1.bf16.msra.mxu0 0
        %760 = vmatprep.subr.bf16.mxu0 0
        %761 = vmatpush1.bf16.msra.mxu0 0
        %762 = vmatprep.subr.bf16.mxu0 0
        %763 = vmatpush1.bf16.msra.mxu0 0
        %764 = vmatprep.subr.bf16.mxu0 0
        %765 = vmatpush1.bf16.msra.mxu0 0
        %766 = vmatprep.subr.bf16.mxu0 0
        %767 = vmatpush1.bf16.msra.mxu0 0
        %768 = vmatprep.subr.bf16.mxu0 0
        %769 = vmatpush1.bf16.msra.mxu0 0
        %770 = vmatprep.mubr.bf16.mxu0 0
        %771 = vmatmul.mubr.bf16.gmra.mrb[0].mxu0 %v730
        %v772 = vpop.f32.mrb[0].mxu0
        %v773 = vadd.f32 0.0, %v772
        %v774 = vpop.f32.mrb[0].mxu0
        %v775 = vadd.f32 0.0, %v774
        %v776 = vpop.f32.mrb[0].mxu0
        %v777 = vpop.f32.mrb[0].mxu0
        %778 = vdwg.mxu0
        %v779 = vadd.f32 %v723, %v773
        %v780 = vadd.f32 %v725, %v775
        %782 = vset.pattern.permute.xlu0 0
        %783 = vperm.xlu0 %782, %v618
        %v784 = vpop.permute.xlu0 %783
        %v786 = vadd.f32 %v779, %v784
        %v787 = vadd.f32 %v780, %v784
        %v788 = vmax.f32 %v786, 0.0
        %v789 = vmax.f32 %v787, 0.0
        %v790 = vpack.c.bf16 %v788, %v788
        %v791 = vpack.c.bf16 %v789, %v789
        %793 = vset.pattern.permute.xlu0 0
        %794 = vperm.xlu0 %793, %v620
        %v795 = vpop.permute.xlu0 %794
        %v798 = vsel %vm627, %v619, 0
        %v801 = vsel %vm631, %v790, 0
        %v804 = vsel %vm631, %v791, 0
        %806 = vmatprep.subr.bf16.mxu0 %v804
        %807 = vmatpush1.bf16.msra.mxu0 %v801
        %808 = vmatprep.subr.bf16.mxu0 0
        %809 = vmatpush1.bf16.msra.mxu0 0
        %810 = vmatprep.subr.bf16.mxu0 0
        %811 = vmatpush1.bf16.msra.mxu0 0
        %812 = vmatprep.subr.bf16.mxu0 0
        %813 = vmatpush1.bf16.msra.mxu0 0
        %814 = vmatprep.subr.bf16.mxu0 0
        %815 = vmatpush1.bf16.msra.mxu0 0
        %816 = vmatprep.subr.bf16.mxu0 0
        %817 = vmatpush1.bf16.msra.mxu0 0
        %818 = vmatprep.subr.bf16.mxu0 0
        %819 = vmatpush1.bf16.msra.mxu0 0
        %820 = vmatprep.subr.bf16.mxu0 0
        %821 = vmatpush1.bf16.msra.mxu0 0
        %822 = vmatprep.subr.bf16.mxu0 0
        %823 = vmatpush1.bf16.msra.mxu0 0
        %824 = vmatprep.subr.bf16.mxu0 0
        %825 = vmatpush1.bf16.msra.mxu0 0
        %826 = vmatprep.subr.bf16.mxu0 0
        %827 = vmatpush1.bf16.msra.mxu0 0
        %828 = vmatprep.subr.bf16.mxu0 0
        %829 = vmatpush1.bf16.msra.mxu0 0
        %830 = vmatprep.subr.bf16.mxu0 0
        %831 = vmatpush1.bf16.msra.mxu0 0
        %832 = vmatprep.subr.bf16.mxu0 0
        %833 = vmatpush1.bf16.msra.mxu0 0
        %834 = vmatprep.subr.bf16.mxu0 0
        %835 = vmatpush1.bf16.msra.mxu0 0
        %836 = vmatprep.subr.bf16.mxu0 0
        %837 = vmatpush1.bf16.msra.mxu0 0
        %838 = vmatprep.mubr.bf16.mxu0 0
        %839 = vmatmul.mubr.bf16.gmra.mrb[0].mxu0 %v798
        %v840 = vpop.f32.mrb[0].mxu0
        %v841 = vadd.f32 %v795, %v840
        %v842 = vpop.f32.mrb[0].mxu0
        %v843 = vadd.f32 %v795, %v842
        %v844 = vpop.f32.mrb[0].mxu0
        %v845 = vpop.f32.mrb[0].mxu0
        %846 = vdwg.mxu0
        %v847 = vpack.c.bf16 %v841, %v841
        %v848 = vpack.c.bf16 %v843, %v843
        %850 = vset.pattern.permute.xlu0 0
        %851 = vperm.xlu0 %850, %v622
        %v852 = vpop.permute.xlu0 %851
        %v855 = vsel %vm627, %v621, 0
        %v858 = vsel %vm631, %v847, 0
        %v861 = vsel %vm631, %v848, 0
        %863 = vmatprep.subr.bf16.mxu0 %v861
        %864 = vmatpush1.bf16.msra.mxu0 %v858
        %865 = vmatprep.subr.bf16.mxu0 0
        %866 = vmatpush1.bf16.msra.mxu0 0
        %867 = vmatprep.subr.bf16.mxu0 0
        %868 = vmatpush1.bf16.msra.mxu0 0
        %869 = vmatprep.subr.bf16.mxu0 0
        %870 = vmatpush1.bf16.msra.mxu0 0
        %871 = vmatprep.subr.bf16.mxu0 0
        %872 = vmatpush1.bf16.msra.mxu0 0
        %873 = vmatprep.subr.bf16.mxu0 0
        %874 = vmatpush1.bf16.msra.mxu0 0
        %875 = vmatprep.subr.bf16.mxu0 0
        %876 = vmatpush1.bf16.msra.mxu0 0
        %877 = vmatprep.subr.bf16.mxu0 0
        %878 = vmatpush1.bf16.msra.mxu0 0
        %879 = vmatprep.subr.bf16.mxu0 0
        %880 = vmatpush1.bf16.msra.mxu0 0
        %881 = vmatprep.subr.bf16.mxu0 0
        %882 = vmatpush1.bf16.msra.mxu0 0
        %883 = vmatprep.subr.bf16.mxu0 0
        %884 = vmatpush1.bf16.msra.mxu0 0
        %885 = vmatprep.subr.bf16.mxu0 0
        %886 = vmatpush1.bf16.msra.mxu0 0
        %887 = vmatprep.subr.bf16.mxu0 0
        %888 = vmatpush1.bf16.msra.mxu0 0
        %889 = vmatprep.subr.bf16.mxu0 0
        %890 = vmatpush1.bf16.msra.mxu0 0
        %891 = vmatprep.subr.bf16.mxu0 0
        %892 = vmatpush1.bf16.msra.mxu0 0
        %893 = vmatprep.subr.bf16.mxu0 0
        %894 = vmatpush1.bf16.msra.mxu0 0
        %895 = vmatprep.mubr.bf16.mxu0 0
        %896 = vmatmul.mubr.bf16.gmra.mrb[0].mxu0 %v855
        %v897 = vpop.f32.mrb[0].mxu0
        %v898 = vadd.f32 %v852, %v897
        %v899 = vpop.f32.mrb[0].mxu0
        %v900 = vadd.f32 %v852, %v899
        %v901 = vpop.f32.mrb[0].mxu0
        %v902 = vpop.f32.mrb[0].mxu0
        %903 = vdwg.mxu0
        %v904 = vsub.f32 0.0, %v898
        %v905 = vsub.f32 0.0, %v900
        %v906 = vmul.f32 %v904, 1.442695
        %v907 = vpow.pop %v906
        %v908 = vmul.f32 %v905, 1.442695
        %v909 = vpow.pop %v908
        %v910 = vadd.f32 %v907, 1.0
        %v911 = vadd.f32 %v909, 1.0
        %v912 = vrcp.pop %v910
        %v913 = vmul.f32 1.0, %v912
        %v914 = vrcp.pop %v911
        %v915 = vmul.f32 1.0, %v914
        %v916 = vsub.f32 %v611, %v613
        %v917 = vsub.f32 %v612, %v614
        %v918 = vmul.f32 %v913, %v916
        %v919 = vmul.f32 %v915, %v917
        %v920 = vadd.f32 %v613, %v918
        %v921 = vadd.f32 %v614, %v919
        %922 = vst [vmem:[%s539] sm:$0xff] %v920
        %923 = vst [vmem:[%s539 + $0x8] sm:$0xff] %v921
        %s924 = sand.u32 %s330, 1
        %s925 = scalar_lea.sflag [#allocation4], %s924
        %s926 = sand.u32 %s330, 1
        %s927 = smul.addr %s926, 16
        %s928 = scalar_lea.vmem [#allocation8], %s927
        // Predicated region
        $region81: #{tpu_custom_call.1} parent=67 // pred_check
          %p929 = pneg %p340
        $region82: #{tpu_custom_call.1} parent=67 // pred_check_branch
          %931 = sbr.rel (%p929) target = $region84
        $region83: #{tpu_custom_call.1} parent=67 // pred_region
          %s932 = smul.u32 2, %s37
          %s934 = ssub.s32 256, 256
          %935 = vsyncadd %s925, %s934
          %s936 = smul.addr %s36, 2
          %s937 = sadd.s32 %s932, %s936
          %s938 = smul.addr %s937, 128
          %s939 = scalar_lea.hbm %s12, %s938
          %s941 = sshll.u32 %s928, 4
          %s942 = int_to_ptr.vmem [resolvable:$true] %s941
          %944 = dma.vmem_to_hbm [thread:$0]  %s942, 256, %s939, %s925
        $region84: #{tpu_custom_call.1} parent=67 // pred_fallthru
          _
      $region68: #{tpu_custom_call.1} parent=5 // pred_fallthru
        _
      %p945 = scmp.le.s32.totalorder 2, %s27
      // Predicated region
      $region85: #{tpu_custom_call.1} parent=5 // pred_check
        %p946 = pneg %p945
      $region86: #{tpu_custom_call.1} parent=5 // pred_check_branch
        %948 = sbr.rel (%p946) target = $region88
      $region87: #{tpu_custom_call.1} parent=5 // pred_region
        %s949 = ssub.s32 %s27, 2
        // Predicated region
        $region89: #{tpu_custom_call.1} parent=87 // pred_check
          %p950 = pneg %p346
        $region90: #{tpu_custom_call.1} parent=87 // pred_check_branch
          %952 = sbr.rel (%p950) target = $region92
        $region91: #{tpu_custom_call.1} parent=87 // pred_region
          %s953 = sand.u32 %s331, 1
          %s954 = scalar_lea.sflag [#allocation4], %s953
          %s955 = sand.u32 %s331, 1
          %s956 = smul.addr %s955, 16
          %s957 = scalar_lea.vmem [#allocation8], %s956
          %958 = dma.done %s954, 256
        $region92: #{tpu_custom_call.1} parent=87 // pred_fallthru
          _
      $region88: #{tpu_custom_call.1} parent=5 // pred_fallthru
        _
    $region6: #{tpu_custom_call.1} parent=1 // loop_footer
      %s31 = sadd.s32 1, %s27
    $region7: #{tpu_custom_call.1} parent=1 // loop_footer_branch
      %26 = sbr.rel target = $region3
    $region8: #{tpu_custom_call.1} parent=1 // loop_exit
      _
    %959 = vsyncpa [#allocation3], 1
    %s960 = scalar_lea.sflag [#allocation3], 1
    %961 = vsyncpa %s960, 1
    %962 = vsyncpa [#allocation6], 1
    %s963 = scalar_lea.sflag [#allocation6], 1
    %964 = vsyncpa %s963, 1
    %965 = vsyncpa [#allocation4], 1
    %s966 = scalar_lea.sflag [#allocation4], 1
    %967 = vsyncpa %s966, 1

</llo_original>
